<compile_context>
chip_gen: v7x
topology: tpu7x:2x2x1
jax: 0.10.0
libtpu: 0.0.40
codegen_flags: <defaults>
</compile_context>

<pallas_src>
import functools

import jax
import jax.numpy as jnp
from jax.experimental import pallas as pl
from jax.experimental.pallas import tpu as pltpu


# ---------------------------------------------------------------------------
# helpers
# ---------------------------------------------------------------------------

def _round_up(x, m):
    return ((x + m - 1) // m) * m


def _choose_row_tile(m, max_tile=512):
    """Row tile (multiple of 8, <= max_tile) and padded row count.

    Small problems use (about) half the rows per step so the grid has >= 2
    steps and both v7x TensorCores get work; large problems tile at 512 rows
    (big enough that per-step pipeline overhead is amortized, small enough to
    stay far below v7x's 64 MiB VMEM with double buffering).
    """
    m8 = _round_up(max(m, 1), 8)
    if m8 <= 8:
        return m8, m8
    tm = min(max_tile, _round_up((m8 + 1) // 2, 8))
    m_pad = _round_up(m8, tm)
    return tm, m_pad


def _pad_rows(x, m_pad):
    m = x.shape[0]
    if m_pad == m:
        return x
    return jnp.pad(x, ((0, m_pad - m), (0, 0)))


# ---------------------------------------------------------------------------
# Pallas kernels
# ---------------------------------------------------------------------------

def _embed_score_kernel(x_ref, we_ref, be_ref, w1_ref, b1_ref, w2_ref, b2_ref,
                        emb_ref, sc_ref):
    """Fused span embedder + span scorer for ALL entity types (stacked lanes).

    emb    = tanh(x @ We + be)                  We: (2D, E_pad) stacked types
    scores = relu(emb @ W1 + b1) @ W2 + b2      W1/W2: block-diagonal per type
    MXU inputs are bf16; accumulation & nonlinearities are f32.
    """
    x = x_ref[...]
    e = jnp.tanh(
        jnp.dot(x, we_ref[...], preferred_element_type=jnp.float32)
        + be_ref[...])
    emb_ref[...] = e
    h = jnp.maximum(
        jnp.dot(e.astype(w1_ref.dtype), w1_ref[...],
                preferred_element_type=jnp.float32) + b1_ref[...], 0.0)
    sc_ref[...] = jnp.dot(h.astype(w2_ref.dtype), w2_ref[...],
                          preferred_element_type=jnp.float32) + b2_ref[...]


def embed_and_score(x, we, be, w1, b1, w2, b2, max_tile=512):
    """x: (M, 2D) f32 -> (emb (M, E_pad), scores (M, L_pad)) f32."""
    m, kdim = x.shape
    ep, hp, lp = we.shape[1], w1.shape[1], w2.shape[1]
    tm, m_pad = _choose_row_tile(m, max_tile)
    x_p = _pad_rows(x, m_pad).astype(jnp.bfloat16)
    emb, sc = pl.pallas_call(
        _embed_score_kernel,
        out_shape=(jax.ShapeDtypeStruct((m_pad, ep), jnp.float32),
                   jax.ShapeDtypeStruct((m_pad, lp), jnp.float32)),
        grid_spec=pl.GridSpec(
            grid=(m_pad // tm,),
            in_specs=[
                pl.BlockSpec((tm, kdim), lambda i: (i, 0)),
                pl.BlockSpec((kdim, ep), lambda i: (0, 0)),
                pl.BlockSpec((1, ep), lambda i: (0, 0)),
                pl.BlockSpec((ep, hp), lambda i: (0, 0)),
                pl.BlockSpec((1, hp), lambda i: (0, 0)),
                pl.BlockSpec((hp, lp), lambda i: (0, 0)),
                pl.BlockSpec((1, lp), lambda i: (0, 0)),
            ],
            out_specs=(pl.BlockSpec((tm, ep), lambda i: (i, 0)),
                       pl.BlockSpec((tm, lp), lambda i: (i, 0))),
        ),
        compiler_params=pltpu.CompilerParams(
            dimension_semantics=("parallel",)),
    )(x_p, we.astype(jnp.bfloat16), be.reshape(1, ep),
      w1.astype(jnp.bfloat16), b1.reshape(1, hp),
      w2.astype(jnp.bfloat16), b2.reshape(1, lp))
    return emb[:m], sc[:m]


def _matmul_kernel(x_ref, w_ref, o_ref):
    o_ref[...] = jnp.dot(x_ref[...], w_ref[...],
                         preferred_element_type=jnp.float32)


def matmul_rows(x, w, max_tile=512):
    """o = x @ w, row-tiled; MXU inputs bf16, f32 accumulation/output."""
    m, kdim = x.shape
    n = w.shape[1]
    tm, m_pad = _choose_row_tile(m, max_tile)
    out = pl.pallas_call(
        _matmul_kernel,
        out_shape=jax.ShapeDtypeStruct((m_pad, n), jnp.float32),
        grid_spec=pl.GridSpec(
            grid=(m_pad // tm,),
            in_specs=[pl.BlockSpec((tm, kdim), lambda i: (i, 0)),
                      pl.BlockSpec((kdim, n), lambda i: (0, 0))],
            out_specs=pl.BlockSpec((tm, n), lambda i: (i, 0)),
        ),
        compiler_params=pltpu.CompilerParams(
            dimension_semantics=("parallel",)),
    )(_pad_rows(x, m_pad).astype(jnp.bfloat16), w.astype(jnp.bfloat16))
    return out[:m]


def _role_pair_kernel(hh_ref, ht_ref, b1_ref, w2_ref, b2_ref, o_ref, *, k):
    """Role scorer over all K*K head/tail pairs of one sequence.

    pair(i, j) hidden = relu(hh[i] + ht[j] + b1)     (formed in VMEM only)
    score(i, j)       = hidden @ W2 + b2
    """
    hh = hh_ref[0]                 # (K, Hp) head-side first-layer contributions
    ht = ht_ref[0]                 # (K, Hp) tail-side first-layer contributions
    b1 = b1_ref[...]               # (1, Hp)
    w2 = w2_ref[...]
    b2 = b2_ref[...]
    for i in range(k):             # static unroll; K = top_k is small
        h_i = jnp.maximum(hh[i:i + 1, :] + ht + b1, 0.0)          # (K, Hp)
        y_i = jnp.dot(h_i.astype(w2.dtype), w2,
                      preferred_element_type=jnp.float32) + b2     # (K, Op)
        o_ref[0, i, :, :] = y_i


def role_pair_scores(hh, ht, b1, w2, b2):
    """hh/ht: (B, K, Hp) f32 -> (B, K, K, O_pad) f32."""
    b, k, hp = hh.shape
    op = w2.shape[1]
    return pl.pallas_call(
        functools.partial(_role_pair_kernel, k=k),
        out_shape=jax.ShapeDtypeStruct((b, k, k, op), jnp.float32),
        grid_spec=pl.GridSpec(
            grid=(b,),
            in_specs=[
                pl.BlockSpec((1, k, hp), lambda i: (i, 0, 0)),
                pl.BlockSpec((1, k, hp), lambda i: (i, 0, 0)),
                pl.BlockSpec((1, hp), lambda i: (0, 0)),
                pl.BlockSpec((hp, op), lambda i: (0, 0)),
                pl.BlockSpec((1, op), lambda i: (0, 0)),
            ],
            out_specs=pl.BlockSpec((1, k, k, op), lambda i: (i, 0, 0, 0)),
        ),
        compiler_params=pltpu.CompilerParams(
            dimension_semantics=("parallel",)),
    )(hh, ht, b1.reshape(1, hp), w2.astype(jnp.bfloat16), b2.reshape(1, op))


# ---------------------------------------------------------------------------
# plain-JAX glue (below-one-vreg reductions / data-dependent gathers / top-k)
# ---------------------------------------------------------------------------

def get_seq_length(span_mask, span_indices):
    # (B, S) int reduction: far below one vreg -> plain JAX, no kernel launch.
    end_indices = span_indices[:, :, 1].astype(jnp.int32)
    return jnp.max(span_mask.astype(jnp.int32) * end_indices, axis=1)


# ---------------------------------------------------------------------------
# RelationExtractor (forward only), parameters built deterministically
# ---------------------------------------------------------------------------

class RelationExtractorPallas:
    def __init__(self, entity_definition, relation_definition, input_dim,
                 span_embed_dim=32, span_scorer_hidden_dim=32,
                 spans_per_word=1, role_hidden_dim=32, role_output_dim=2,
                 top_k=4, seed=0):
        self.entity_definition = entity_definition          # {type: n_labels}
        self.relation_definition = relation_definition      # {rel: (head, tail)}
        self.input_dim = input_dim
        self.embed_dim = span_embed_dim
        self.hidden_dim = span_scorer_hidden_dim
        self.spans_per_word = spans_per_word
        self.role_hidden_dim = role_hidden_dim
        self.role_output_dim = role_output_dim
        self.top_k = top_k

        key = jax.random.PRNGKey(seed)

        def init(k, shape, scale=0.1):
            return scale * jax.random.normal(k, shape, dtype=jnp.float32)

        # ------- per-type / per-relation raw parameters ----------------------
        self.params = {}
        i = 0
        for etype, n_labels in entity_definition.items():
            ks = jax.random.split(jax.random.fold_in(key, i), 6)
            i += 1
            self.params[etype] = dict(
                w_embed=init(ks[0], (2 * input_dim, span_embed_dim)),
                b_embed=jnp.zeros((span_embed_dim,), jnp.float32),
                w1=init(ks[1], (span_embed_dim, span_scorer_hidden_dim)),
                b1=jnp.zeros((span_scorer_hidden_dim,), jnp.float32),
                w2=init(ks[2], (span_scorer_hidden_dim, n_labels)),
                b2=jnp.zeros((n_labels,), jnp.float32),
            )
        for rtype in relation_definition:
            ks = jax.random.split(jax.random.fold_in(key, 1000 + i), 4)
            i += 1
            self.params[rtype] = dict(
                w1=init(ks[0], (2 * span_embed_dim, role_hidden_dim)),
                b1=jnp.zeros((role_hidden_dim,), jnp.float32),
                w2=init(ks[1], (role_hidden_dim, role_output_dim)),
                b2=jnp.zeros((role_output_dim,), jnp.float32),
            )

        # ------- stacked / block-diagonal entity params (one kernel/stage) ---
        self.etypes = list(entity_definition.keys())
        T, E, H = len(self.etypes), span_embed_dim, span_scorer_hidden_dim
        self.label_counts, self.label_offsets = [], []
        off = 0
        for et in self.etypes:
            self.label_counts.append(entity_definition[et])
            self.label_offsets.append(off)
            off += entity_definition[et]
        self.L_tot = off
        self.E_pad = _round_up(T * E, 128)
        self.H_pad = _round_up(T * H, 128)
        self.L_pad = _round_up(max(self.L_tot, 1), 128)

        we = jnp.zeros((2 * input_dim, self.E_pad), jnp.float32)
        be = jnp.zeros((self.E_pad,), jnp.float32)
        w1 = jnp.zeros((self.E_pad, self.H_pad), jnp.float32)
        b1 = jnp.zeros((self.H_pad,), jnp.float32)
        w2 = jnp.zeros((self.H_pad, self.L_pad), jnp.float32)
        b2 = jnp.zeros((self.L_pad,), jnp.float32)
        for t, etype in enumerate(self.etypes):
            p = self.params[etype]
            lo, lc = self.label_offsets[t], self.label_counts[t]
            we = we.at[:, t * E:(t + 1) * E].set(p["w_embed"])
            be = be.at[t * E:(t + 1) * E].set(p["b_embed"])
            w1 = w1.at[t * E:(t + 1) * E, t * H:(t + 1) * H].set(p["w1"])
            b1 = b1.at[t * H:(t + 1) * H].set(p["b1"])
            w2 = w2.at[t * H:(t + 1) * H, lo:lo + lc].set(p["w2"])
            b2 = b2.at[lo:lo + lc].set(p["b2"])
        self.stacked_entity = dict(we=we, be=be, w1=w1, b1=b1, w2=w2, b2=b2)

        # ------- stacked / factorized relation params -------------------------
        self.rtypes = list(relation_definition.keys())
        R, RH, O = len(self.rtypes), role_hidden_dim, role_output_dim
        self.R = R
        if R > 0:
            self.RH_pad = _round_up(R * RH, 128)
            self.O_pad = _round_up(R * O, 128)
            ER = R * E
            # one matmul produces [head-hidden | tail-hidden] (lane-dense halves)
            w1r = jnp.zeros((2 * ER, 2 * self.RH_pad), jnp.float32)
            b1r = jnp.zeros((self.RH_pad,), jnp.float32)
            w2r = jnp.zeros((self.RH_pad, self.O_pad), jnp.float32)
            b2r = jnp.zeros((self.O_pad,), jnp.float32)
            for r, rtype in enumerate(self.rtypes):
                p = self.params[rtype]
                w1r = w1r.at[r * E:(r + 1) * E,
                             r * RH:(r + 1) * RH].set(p["w1"][:E, :])
                w1r = w1r.at[ER + r * E:ER + (r + 1) * E,
                             self.RH_pad + r * RH:
                             self.RH_pad + (r + 1) * RH].set(p["w1"][E:, :])
                b1r = b1r.at[r * RH:(r + 1) * RH].set(p["b1"])
                w2r = w2r.at[r * RH:(r + 1) * RH, r * O:(r + 1) * O].set(p["w2"])
                b2r = b2r.at[r * O:(r + 1) * O].set(p["b2"])
            self.stacked_role = dict(w1=w1r, b1=b1r, w2=w2r, b2=b2r)

    # -- fused span embedder + span scorer (one pallas_call for all types) ----
    def _embed_and_score(self, seq_tensor, span_indices):
        B, Tlen, D = seq_tensor.shape
        S = span_indices.shape[1]
        starts = jnp.clip(span_indices[:, :, 0], 0, Tlen - 1)
        ends = jnp.clip(span_indices[:, :, 1] - 1, 0, Tlen - 1)
        # TODO(synk): data-dependent start/end token gather stays in XLA glue.
        start_tok = jnp.take_along_axis(seq_tensor, starts[:, :, None], axis=1)
        end_tok = jnp.take_along_axis(seq_tensor, ends[:, :, None], axis=1)
        span_repr = jnp.concatenate([start_tok, end_tok], axis=-1)   # (B,S,2D)
        x = span_repr.reshape(B * S, 2 * D)

        se = self.stacked_entity
        emb, sc = embed_and_score(x, se["we"], se["be"], se["w1"], se["b1"],
                                  se["w2"], se["b2"])
        E = self.embed_dim
        embeddings, span_scores = {}, {}
        for t, etype in enumerate(self.etypes):
            lo, lc = self.label_offsets[t], self.label_counts[t]
            embeddings[etype] = emb[:, t * E:(t + 1) * E].reshape(B, S, E)
            span_scores[etype] = sc[:, lo:lo + lc].reshape(B, S, lc)
        return embeddings, span_scores

    # -- span pruner: keep top-k spans by max non-null score -------------------
    def _prune(self, embeddings, span_scores, span_mask, seq_length):
        K = self.top_k
        top_indices, top_embeddings, top_mask = {}, {}, {}
        num_keep = jnp.minimum(K, self.spans_per_word * seq_length)    # (B,)
        for etype in self.etypes:
            scores = span_scores[etype]
            if scores.shape[-1] > 1:
                prune_score = jnp.max(scores[:, :, 1:], axis=-1)       # non-null
            else:
                prune_score = scores[:, :, 0]
            prune_score = jnp.where(span_mask > 0, prune_score, -1e9)
            # TODO(synk): top-k selection has no clean Pallas equivalent; JAX glue.
            _, idx = jax.lax.top_k(prune_score, K)                     # (B,K)
            top_indices[etype] = idx
            top_embeddings[etype] = jnp.take_along_axis(
                embeddings[etype], idx[:, :, None], axis=1)            # (B,K,E)
            gathered_mask = jnp.take_along_axis(span_mask, idx, axis=1)
            rank_ok = (jnp.arange(K)[None, :] < num_keep[:, None])
            top_mask[etype] = (gathered_mask > 0) & rank_ok
        return top_indices, top_embeddings, top_mask

    # -- role scorer: factorized first layer + in-kernel pair broadcast --------
    def _score_roles(self, top_embeddings):
        if self.R == 0:
            return {}
        K, E, R, O = self.top_k, self.embed_dim, self.R, self.role_output_dim
        head = jnp.concatenate(
            [top_embeddings[self.relation_definition[rt][0]]
             for rt in self.rtypes], axis=-1)                          # (B,K,E*R)
        tail = jnp.concatenate(
            [top_embeddings[self.relation_definition[rt][1]]
             for rt in self.rtypes], axis=-1)                          # (B,K,E*R)
        B = head.shape[0]
        x = jnp.concatenate([head, tail], axis=-1).reshape(B * K, 2 * E * R)

        sr = self.stacked_role
        hidden = matmul_rows(x, sr["w1"])                 # (B*K, 2*RH_pad)
        hh = hidden[:, :self.RH_pad].reshape(B, K, self.RH_pad)
        ht = hidden[:, self.RH_pad:].reshape(B, K, self.RH_pad)

        out = role_pair_scores(hh, ht, sr["b1"], sr["w2"], sr["b2"])
        scores = {}
        for r, rtype in enumerate(self.rtypes):
            scores[rtype] = out[..., r * O:(r + 1) * O]               # (B,K,K,O)
        return scores

    # -- forward ---------------------------------------------------------------
    def forward(self, seq_tensor, span_indices, span_mask):
        embeddings, span_scores = self._embed_and_score(seq_tensor, span_indices)
        seq_length = get_seq_length(span_mask, span_indices)
        top_indices, top_embeddings, top_span_mask = self._prune(
            embeddings, span_scores, span_mask, seq_length)
        top_role_scores = self._score_roles(top_embeddings)
        # create_doc_vector defaults to False in the PyTorch module.
        # TODO(synk): doc-vector attention branch (create_doc_vector=True) not implemented.
        return span_scores, top_role_scores, top_span_mask, top_indices


# ---------------------------------------------------------------------------
# Example run
# ---------------------------------------------------------------------------

if __name__ == "__main__":
    B, T, D = 2, 16, 32        # batch (sequence count), seq len, input dim
    S = 8                      # candidate span count per sequence

    entity_definition = {"TypeA": 3, "TypeB": 2}
    relation_definition = {"RelA": ("TypeA", "TypeB")}

    key = jax.random.PRNGKey(0)
    k_seq, k_start, k_width, k_mask = jax.random.split(key, 4)

    seq_tensor = jax.random.normal(k_seq, (B, T, D), dtype=jnp.float32)
    starts = jax.random.randint(k_start, (B, S), 0, T - 2)
    widths = jax.random.randint(k_width, (B, S), 1, 4)
    ends = jnp.minimum(starts + widths, T)
    span_indices = jnp.stack([starts, ends], axis=-1).astype(jnp.int32)  # (B,S,2)
    span_mask = (jax.random.uniform(k_mask, (B, S)) > 0.2).astype(jnp.int32)
    span_mask = span_mask.at[:, 0].set(1)  # ensure at least one valid span

    model = RelationExtractorPallas(entity_definition, relation_definition,
                                    input_dim=D)
    span_scores, top_role_scores, top_span_mask, top_indices = model.forward(
        seq_tensor, span_indices, span_mask)

    jax.block_until_ready((span_scores, top_role_scores, top_span_mask,
                           top_indices))
    print("KERNEL_OK")
</pallas_src>

<mosaic_0001>
module attributes {stable_mosaic.version = 11 : i64} {
  func.func @_embed_score_kernel(%arg0: i32, %arg1: memref<8x64xbf16, #tpu.memory_space<vmem>>, %arg2: memref<64x128xbf16, #tpu.memory_space<vmem>>, %arg3: memref<1x128xf32, #tpu.memory_space<vmem>>, %arg4: memref<128x128xbf16, #tpu.memory_space<vmem>>, %arg5: memref<1x128xf32, #tpu.memory_space<vmem>>, %arg6: memref<128x128xbf16, #tpu.memory_space<vmem>>, %arg7: memref<1x128xf32, #tpu.memory_space<vmem>>, %arg8: memref<8x128xf32, #tpu.memory_space<vmem>>, %arg9: memref<8x128xf32, #tpu.memory_space<vmem>>) attributes {dimension_semantics = [#tpu.dimension_semantics<parallel>], iteration_bounds = array<i64: 2>, scalar_prefetch = 0 : i64, scratch_operands = 0 : i64, tpu.core_type = #tpu.core_type<tc>, window_params = [{transform_indices = @transform_0, window_bounds = array<i64: 8, 64>}, {pipeline_mode = #tpu.pipeline_mode<synchronous>, transform_indices = @transform_1, window_bounds = array<i64: 64, 128>}, {pipeline_mode = #tpu.pipeline_mode<synchronous>, transform_indices = @transform_2, window_bounds = array<i64: 1, 128>}, {pipeline_mode = #tpu.pipeline_mode<synchronous>, transform_indices = @transform_3, window_bounds = array<i64: 128, 128>}, {pipeline_mode = #tpu.pipeline_mode<synchronous>, transform_indices = @transform_4, window_bounds = array<i64: 1, 128>}, {pipeline_mode = #tpu.pipeline_mode<synchronous>, transform_indices = @transform_5, window_bounds = array<i64: 128, 128>}, {pipeline_mode = #tpu.pipeline_mode<synchronous>, transform_indices = @transform_6, window_bounds = array<i64: 1, 128>}, {transform_indices = @transform_7, window_bounds = array<i64: 8, 128>}, {transform_indices = @transform_8, window_bounds = array<i64: 8, 128>}]} {
    %c0 = arith.constant 0 : index
    %c0_0 = arith.constant 0 : index
    %0 = vector.load %arg1[%c0, %c0_0] : memref<8x64xbf16, #tpu.memory_space<vmem>>, vector<8x64xbf16>
    %c0_1 = arith.constant 0 : index
    %c0_2 = arith.constant 0 : index
    %1 = vector.load %arg2[%c0_1, %c0_2] : memref<64x128xbf16, #tpu.memory_space<vmem>>, vector<64x128xbf16>
    %cst = arith.constant dense<0.000000e+00> : vector<8x128xf32>
    %2 = tpu.matmul %0, %1, %cst {dimension_numbers = #tpu.dot_dimension_numbers<[1], [0], [0], [1], [0, 0, 1, 1], [], []>} : vector<8x64xbf16>, vector<64x128xbf16>, vector<8x128xf32> -> vector<8x128xf32>
    %c0_3 = arith.constant 0 : index
    %c0_4 = arith.constant 0 : index
    %3 = vector.load %arg3[%c0_3, %c0_4] : memref<1x128xf32, #tpu.memory_space<vmem>>, vector<1x128xf32>
    %4 = vector.broadcast %3 : vector<1x128xf32> to vector<8x128xf32>
    %5 = arith.addf %2, %4 : vector<8x128xf32>
    %6 = math.tanh %5 : vector<8x128xf32>
    %c0_5 = arith.constant 0 : index
    %c0_6 = arith.constant 0 : index
    %7 = vector.load %arg8[%c0_5, %c0_6] : memref<8x128xf32, #tpu.memory_space<vmem>>, vector<8x128xf32>
    tpu.vector_store %arg8[%c0_5, %c0_6], %6 {strides = array<i32>} : memref<8x128xf32, #tpu.memory_space<vmem>>, vector<8x128xf32>,
    %8 = arith.truncf %6 : vector<8x128xf32> to vector<8x128xbf16>
    %c0_7 = arith.constant 0 : index
    %c0_8 = arith.constant 0 : index
    %9 = vector.load %arg4[%c0_7, %c0_8] : memref<128x128xbf16, #tpu.memory_space<vmem>>, vector<128x128xbf16>
    %cst_9 = arith.constant dense<0.000000e+00> : vector<8x128xf32>
    %10 = tpu.matmul %8, %9, %cst_9 {dimension_numbers = #tpu.dot_dimension_numbers<[1], [0], [0], [1], [0, 0, 1, 1], [], []>} : vector<8x128xbf16>, vector<128x128xbf16>, vector<8x128xf32> -> vector<8x128xf32>
    %c0_10 = arith.constant 0 : index
    %c0_11 = arith.constant 0 : index
    %11 = vector.load %arg5[%c0_10, %c0_11] : memref<1x128xf32, #tpu.memory_space<vmem>>, vector<1x128xf32>
    %12 = vector.broadcast %11 : vector<1x128xf32> to vector<8x128xf32>
    %13 = arith.addf %10, %12 : vector<8x128xf32>
    %cst_12 = arith.constant 0.000000e+00 : f32
    %14 = vector.broadcast %cst_12 : f32 to vector<8x128xf32>
    %15 = arith.maximumf %13, %14 : vector<8x128xf32>
    %16 = arith.truncf %15 : vector<8x128xf32> to vector<8x128xbf16>
    %c0_13 = arith.constant 0 : index
    %c0_14 = arith.constant 0 : index
    %17 = vector.load %arg6[%c0_13, %c0_14] : memref<128x128xbf16, #tpu.memory_space<vmem>>, vector<128x128xbf16>
    %cst_15 = arith.constant dense<0.000000e+00> : vector<8x128xf32>
    %18 = tpu.matmul %16, %17, %cst_15 {dimension_numbers = #tpu.dot_dimension_numbers<[1], [0], [0], [1], [0, 0, 1, 1], [], []>} : vector<8x128xbf16>, vector<128x128xbf16>, vector<8x128xf32> -> vector<8x128xf32>
    %c0_16 = arith.constant 0 : index
    %c0_17 = arith.constant 0 : index
    %19 = vector.load %arg7[%c0_16, %c0_17] : memref<1x128xf32, #tpu.memory_space<vmem>>, vector<1x128xf32>
    %20 = vector.broadcast %19 : vector<1x128xf32> to vector<8x128xf32>
    %21 = arith.addf %18, %20 : vector<8x128xf32>
    %c0_18 = arith.constant 0 : index
    %c0_19 = arith.constant 0 : index
    %22 = vector.load %arg9[%c0_18, %c0_19] : memref<8x128xf32, #tpu.memory_space<vmem>>, vector<8x128xf32>
    tpu.vector_store %arg9[%c0_18, %c0_19], %21 {strides = array<i32>} : memref<8x128xf32, #tpu.memory_space<vmem>>, vector<8x128xf32>,
    return
  }
  func.func @transform_0(%arg0: i32) -> (i32, i32) {
    %c0_i32 = arith.constant 0 : i32
    %c0_i32_0 = arith.constant 0 : i32
    return %arg0, %c0_i32 : i32, i32
  }
  func.func @transform_1(%arg0: i32) -> (i32, i32) {
    %c0_i32 = arith.constant 0 : i32
    %c0_i32_0 = arith.constant 0 : i32
    %c0_i32_1 = arith.constant 0 : i32
    return %c0_i32, %c0_i32_0 : i32, i32
  }
  func.func @transform_2(%arg0: i32) -> (i32, i32) {
    %c0_i32 = arith.constant 0 : i32
    %c0_i32_0 = arith.constant 0 : i32
    %c0_i32_1 = arith.constant 0 : i32
    return %c0_i32, %c0_i32_0 : i32, i32
  }
  func.func @transform_3(%arg0: i32) -> (i32, i32) {
    %c0_i32 = arith.constant 0 : i32
    %c0_i32_0 = arith.constant 0 : i32
    %c0_i32_1 = arith.constant 0 : i32
    return %c0_i32, %c0_i32_0 : i32, i32
  }
  func.func @transform_4(%arg0: i32) -> (i32, i32) {
    %c0_i32 = arith.constant 0 : i32
    %c0_i32_0 = arith.constant 0 : i32
    %c0_i32_1 = arith.constant 0 : i32
    return %c0_i32, %c0_i32_0 : i32, i32
  }
  func.func @transform_5(%arg0: i32) -> (i32, i32) {
    %c0_i32 = arith.constant 0 : i32
    %c0_i32_0 = arith.constant 0 : i32
    %c0_i32_1 = arith.constant 0 : i32
    return %c0_i32, %c0_i32_0 : i32, i32
  }
  func.func @transform_6(%arg0: i32) -> (i32, i32) {
    %c0_i32 = arith.constant 0 : i32
    %c0_i32_0 = arith.constant 0 : i32
    %c0_i32_1 = arith.constant 0 : i32
    return %c0_i32, %c0_i32_0 : i32, i32
  }
  func.func @transform_7(%arg0: i32) -> (i32, i32) {
    %c0_i32 = arith.constant 0 : i32
    %c0_i32_0 = arith.constant 0 : i32
    return %arg0, %c0_i32 : i32, i32
  }
  func.func @transform_8(%arg0: i32) -> (i32, i32) {
    %c0_i32 = arith.constant 0 : i32
    %c0_i32_0 = arith.constant 0 : i32
    return %arg0, %c0_i32 : i32, i32
  }
}

</mosaic_0001>

<llo_original>
// kernel: tpu_custom_call.1
$region0: #{tpu_custom_call.1}
  #allocation0 [shape = 'u32[]', space=smem, size = 0x4, offset = 0x4, fixed_abs, tag = 'smem constant byte address 0x4 - core index']
  #allocation1 [shape = 'u32[144,128]{1,0:T(1,128)}', space=vmem, size = 0x12000, scoped, tag = 'internal scratch']
  %s0 = inlined_call_operand.hbm [shape: bf16[16,64], index: 0, kind: input, shape index: {}]
  %s1 = inlined_call_operand.hbm [shape: bf16[64,128], index: 1, kind: input, shape index: {}]
  %s2 = inlined_call_operand.vmem [shape: f32[1,128], index: 2, kind: input, shape index: {}]
  %s3 = inlined_call_operand.hbm [shape: bf16[128,128], index: 3, kind: input, shape index: {}]
  %s4 = inlined_call_operand.vmem [shape: f32[1,128], index: 4, kind: input, shape index: {}]
  %s5 = inlined_call_operand.hbm [shape: bf16[128,128], index: 5, kind: input, shape index: {}]
  %s6 = inlined_call_operand.vmem [shape: f32[1,128], index: 6, kind: input, shape index: {}]
  %s7 = inlined_call_operand.hbm [shape: f32[16,128], index: 7, kind: output, shape index: {0}]
  %s8 = inlined_call_operand.hbm [shape: f32[16,128], index: 8, kind: output, shape index: {1}]
  %9 = xla_tuple %s7, %s8
  %s10 = sld [smem:[#allocation0]]
  $region85: #{tpu_custom_call.1} parent=0
    _
  %s12 = ssub.s32 1, %s10
  %s13 = scalar_select 0, %s12, %s10
  $region1: #{tpu_custom_call.1} parent=0
    #allocation2 [shape = 'u8[4096]{0}', space=vmem, size = 0x1000, scoped, tag = 'input window, operand 0']
    #allocation3 [shape = 's32[2]{0}', space=sflag, size = 0x8, scoped, tag = 'scoped memory for tpu_custom_call.1']
    #allocation4 [shape = 's32[2]{0}', space=sflag, size = 0x8, scoped, tag = 'scoped memory for tpu_custom_call.1']
    #allocation5 [shape = 'u8[16384]{0}', space=vmem, size = 0x4000, scoped, tag = 'input window, operand 1, single buffered']
    #allocation6 [shape = 's32[1]{0}', space=sflag, size = 0x4, scoped, tag = 'scoped memory for tpu_custom_call.1']
    #allocation7 [shape = 'u8[32768]{0}', space=vmem, size = 0x8000, scoped, tag = 'input window, operand 3, single buffered']
    #allocation8 [shape = 'u8[32768]{0}', space=vmem, size = 0x8000, scoped, tag = 'input window, operand 5, single buffered']
    #allocation9 [shape = 's32[1]{0}', space=sflag, size = 0x4, scoped, tag = 'scoped memory for tpu_custom_call.1']
    #allocation10 [shape = 'u8[8192]{0}', space=vmem, size = 0x2000, scoped, tag = 'output window, operand 0']
    #allocation11 [shape = 'u8[8192]{0}', space=vmem, size = 0x2000, scoped, tag = 'output window, operand 1']
    #allocation12 [shape = 's32[2]{0}', space=sflag, size = 0x8, scoped, tag = 'scoped memory for tpu_custom_call.1']
    %14 = vsyncpa [#allocation3], 0
    %s15 = scalar_lea.sflag [#allocation3], 1
    %16 = vsyncpa %s15, 0
    %17 = vsyncpa [#allocation6], 0
    %18 = vsyncpa [#allocation9], 0
    %19 = vsyncpa [#allocation4], 0
    %s20 = scalar_lea.sflag [#allocation4], 1
    %21 = vsyncpa %s20, 0
    %22 = vsyncpa [#allocation12], 0
    %s23 = scalar_lea.sflag [#allocation12], 1
    %24 = vsyncpa %s23, 0
    loop: start=0, step=1, limit=4
    $region2: #{tpu_custom_call.1} parent=1 // loop_pre_header
      _
    $region3: #{tpu_custom_call.1} parent=1 // loop_header
      %s26 = sphi 0, %s30
      %p27 = scmp.ge.s32.totalorder %s26, 4
      %s36 = sphi 0, %s38
      %s39 = sphi 0, %s36
      %s40 = sphi 0, %s39
      %s56 = sphi 0, %s40
      %s60 = sphi 0, %s60
      %s62 = sphi 0, %s60
      %s63 = sphi 0, %s62
      %s77 = sphi 0, %s63
      %s81 = sphi 0, %s81
      %s83 = sphi 0, %s81
      %s84 = sphi 0, %s83
      %s98 = sphi 0, %s84
      %s102 = sphi 0, %s102
      %s104 = sphi 0, %s102
      %s105 = sphi 0, %s104
      %s119 = sphi 0, %s105
      %s123 = sphi 0, %s123
      %s125 = sphi 0, %s123
      %s126 = sphi 0, %s125
      %s140 = sphi 0, %s126
      %s144 = sphi 0, %s144
      %s146 = sphi 0, %s144
      %s147 = sphi 0, %s146
      %s161 = sphi 0, %s147
      %s165 = sphi 0, %s165
      %s167 = sphi 0, %s165
      %s168 = sphi 0, %s167
      %s182 = sphi 0, %s168
      %s188 = sphi 0, %s190
      %s191 = sphi 0, %s188
      %s192 = sphi 0, %s191
      %s208 = sphi 0, %s192
      %s214 = sphi 0, %s216
      %s217 = sphi 0, %s214
      %s218 = sphi 0, %s217
      %s234 = sphi 0, %s218
    $region4: #{tpu_custom_call.1} parent=1 // loop_header_branch
      %29 = sbr.rel (%p27) target = $region8
    $region5: #{tpu_custom_call.1} parent=1 // loop_body
      %s31 = ssub.s32 %s26, 1
      %s32 = ssub.s32 %s26, 2
      %s33 = sadd.s32 %s26, 1
      %s34 = ssub.s32 %s26, %s33
      %p35 = scmp.eq.s32.totalorder %s34, 0
      %s37 = sadd.s32 %s36, 1
      %s38 = scalar_select %p35, %s36, %s37
      %p41 = pneg %p35
      %p42 = scmp.eq.s32.totalorder %s26, 1
      %p43 = por %p41, %p42
      %p44 = scmp.ne.s32.totalorder %s36, %s39
      %p45 = scmp.eq.s32.totalorder %s26, 0
      %p46 = por %p44, %p45
      %p47 = scmp.ne.s32.totalorder %s36, %s39
      %p48 = scmp.eq.s32.totalorder %s31, 1
      %p49 = por %p47, %p48
      %p50 = scmp.ne.s32.totalorder %s39, %s40
      %p51 = scmp.eq.s32.totalorder %s31, 0
      %p52 = por %p50, %p51
      %p53 = scmp.ne.s32.totalorder %s39, %s40
      %p54 = scmp.eq.s32.totalorder %s32, 1
      %p55 = por %p53, %p54
      %p57 = scmp.ne.s32.totalorder %s40, %s56
      %p58 = scmp.eq.s32.totalorder %s32, 0
      %p59 = por %p57, %p58
      %s61 = sadd.s32 %s60, 1
      %p64 = scmp.eq.s32.totalorder %s26, 1
      %p65 = scmp.ne.s32.totalorder %s60, %s62
      %p66 = scmp.eq.s32.totalorder %s26, 0
      %p67 = por %p65, %p66
      %p68 = scmp.ne.s32.totalorder %s60, %s62
      %p69 = scmp.eq.s32.totalorder %s31, 1
      %p70 = por %p68, %p69
      %p71 = scmp.ne.s32.totalorder %s62, %s63
      %p72 = scmp.eq.s32.totalorder %s31, 0
      %p73 = por %p71, %p72
      %p74 = scmp.ne.s32.totalorder %s62, %s63
      %p75 = scmp.eq.s32.totalorder %s32, 1
      %p76 = por %p74, %p75
      %p78 = scmp.ne.s32.totalorder %s63, %s77
      %p79 = scmp.eq.s32.totalorder %s32, 0
      %p80 = por %p78, %p79
      %s82 = sadd.s32 %s81, 1
      %p85 = scmp.eq.s32.totalorder %s26, 1
      %p86 = scmp.ne.s32.totalorder %s81, %s83
      %p87 = scmp.eq.s32.totalorder %s26, 0
      %p88 = por %p86, %p87
      %p89 = scmp.ne.s32.totalorder %s81, %s83
      %p90 = scmp.eq.s32.totalorder %s31, 1
      %p91 = por %p89, %p90
      %p92 = scmp.ne.s32.totalorder %s83, %s84
      %p93 = scmp.eq.s32.totalorder %s31, 0
      %p94 = por %p92, %p93
      %p95 = scmp.ne.s32.totalorder %s83, %s84
      %p96 = scmp.eq.s32.totalorder %s32, 1
      %p97 = por %p95, %p96
      %p99 = scmp.ne.s32.totalorder %s84, %s98
      %p100 = scmp.eq.s32.totalorder %s32, 0
      %p101 = por %p99, %p100
      %s103 = sadd.s32 %s102, 1
      %p106 = scmp.eq.s32.totalorder %s26, 1
      %p107 = scmp.ne.s32.totalorder %s102, %s104
      %p108 = scmp.eq.s32.totalorder %s26, 0
      %p109 = por %p107, %p108
      %p110 = scmp.ne.s32.totalorder %s102, %s104
      %p111 = scmp.eq.s32.totalorder %s31, 1
      %p112 = por %p110, %p111
      %p113 = scmp.ne.s32.totalorder %s104, %s105
      %p114 = scmp.eq.s32.totalorder %s31, 0
      %p115 = por %p113, %p114
      %p116 = scmp.ne.s32.totalorder %s104, %s105
      %p117 = scmp.eq.s32.totalorder %s32, 1
      %p118 = por %p116, %p117
      %p120 = scmp.ne.s32.totalorder %s105, %s119
      %p121 = scmp.eq.s32.totalorder %s32, 0
      %p122 = por %p120, %p121
      %s124 = sadd.s32 %s123, 1
      %p127 = scmp.eq.s32.totalorder %s26, 1
      %p128 = scmp.ne.s32.totalorder %s123, %s125
      %p129 = scmp.eq.s32.totalorder %s26, 0
      %p130 = por %p128, %p129
      %p131 = scmp.ne.s32.totalorder %s123, %s125
      %p132 = scmp.eq.s32.totalorder %s31, 1
      %p133 = por %p131, %p132
      %p134 = scmp.ne.s32.totalorder %s125, %s126
      %p135 = scmp.eq.s32.totalorder %s31, 0
      %p136 = por %p134, %p135
      %p137 = scmp.ne.s32.totalorder %s125, %s126
      %p138 = scmp.eq.s32.totalorder %s32, 1
      %p139 = por %p137, %p138
      %p141 = scmp.ne.s32.totalorder %s126, %s140
      %p142 = scmp.eq.s32.totalorder %s32, 0
      %p143 = por %p141, %p142
      %s145 = sadd.s32 %s144, 1
      %p148 = scmp.eq.s32.totalorder %s26, 1
      %p149 = scmp.ne.s32.totalorder %s144, %s146
      %p150 = scmp.eq.s32.totalorder %s26, 0
      %p151 = por %p149, %p150
      %p152 = scmp.ne.s32.totalorder %s144, %s146
      %p153 = scmp.eq.s32.totalorder %s31, 1
      %p154 = por %p152, %p153
      %p155 = scmp.ne.s32.totalorder %s146, %s147
      %p156 = scmp.eq.s32.totalorder %s31, 0
      %p157 = por %p155, %p156
      %p158 = scmp.ne.s32.totalorder %s146, %s147
      %p159 = scmp.eq.s32.totalorder %s32, 1
      %p160 = por %p158, %p159
      %p162 = scmp.ne.s32.totalorder %s147, %s161
      %p163 = scmp.eq.s32.totalorder %s32, 0
      %p164 = por %p162, %p163
      %s166 = sadd.s32 %s165, 1
      %p169 = scmp.eq.s32.totalorder %s26, 1
      %p170 = scmp.ne.s32.totalorder %s165, %s167
      %p171 = scmp.eq.s32.totalorder %s26, 0
      %p172 = por %p170, %p171
      %p173 = scmp.ne.s32.totalorder %s165, %s167
      %p174 = scmp.eq.s32.totalorder %s31, 1
      %p175 = por %p173, %p174
      %p176 = scmp.ne.s32.totalorder %s167, %s168
      %p177 = scmp.eq.s32.totalorder %s31, 0
      %p178 = por %p176, %p177
      %p179 = scmp.ne.s32.totalorder %s167, %s168
      %p180 = scmp.eq.s32.totalorder %s32, 1
      %p181 = por %p179, %p180
      %p183 = scmp.ne.s32.totalorder %s168, %s182
      %p184 = scmp.eq.s32.totalorder %s32, 0
      %p185 = por %p183, %p184
      %s186 = ssub.s32 %s26, %s33
      %p187 = scmp.eq.s32.totalorder %s186, 0
      %s189 = sadd.s32 %s188, 1
      %s190 = scalar_select %p187, %s188, %s189
      %p193 = pneg %p187
      %p194 = scmp.eq.s32.totalorder %s26, 1
      %p195 = por %p193, %p194
      %p196 = scmp.ne.s32.totalorder %s188, %s191
      %p197 = scmp.eq.s32.totalorder %s26, 0
      %p198 = por %p196, %p197
      %p199 = scmp.ne.s32.totalorder %s188, %s191
      %p200 = scmp.eq.s32.totalorder %s31, 1
      %p201 = por %p199, %p200
      %p202 = scmp.ne.s32.totalorder %s191, %s192
      %p203 = scmp.eq.s32.totalorder %s31, 0
      %p204 = por %p202, %p203
      %p205 = scmp.ne.s32.totalorder %s191, %s192
      %p206 = scmp.eq.s32.totalorder %s32, 1
      %p207 = por %p205, %p206
      %p209 = scmp.ne.s32.totalorder %s192, %s208
      %p210 = scmp.eq.s32.totalorder %s32, 0
      %p211 = por %p209, %p210
      %s212 = ssub.s32 %s26, %s33
      %p213 = scmp.eq.s32.totalorder %s212, 0
      %s215 = sadd.s32 %s214, 1
      %s216 = scalar_select %p213, %s214, %s215
      %p219 = pneg %p213
      %p220 = scmp.eq.s32.totalorder %s26, 1
      %p221 = por %p219, %p220
      %p222 = scmp.ne.s32.totalorder %s214, %s217
      %p223 = scmp.eq.s32.totalorder %s26, 0
      %p224 = por %p222, %p223
      %p225 = scmp.ne.s32.totalorder %s214, %s217
      %p226 = scmp.eq.s32.totalorder %s31, 1
      %p227 = por %p225, %p226
      %p228 = scmp.ne.s32.totalorder %s217, %s218
      %p229 = scmp.eq.s32.totalorder %s31, 0
      %p230 = por %p228, %p229
      %p231 = scmp.ne.s32.totalorder %s217, %s218
      %p232 = scmp.eq.s32.totalorder %s32, 1
      %p233 = por %p231, %p232
      %p235 = scmp.ne.s32.totalorder %s218, %s234
      %p236 = scmp.eq.s32.totalorder %s32, 0
      %p237 = por %p235, %p236
      %p238 = scmp.le.s32.totalorder 1, %s26
      %p239 = scmp.lt.s32.totalorder %s26, 3
      %p240 = pnand %p238, %p239
      %p241 = pneg %p240
      // Predicated region
      $region9: #{tpu_custom_call.1} parent=5 // pred_check
        _
      $region10: #{tpu_custom_call.1} parent=5 // pred_check_branch
        %243 = sbr.rel (%p240) target = $region12
      $region11: #{tpu_custom_call.1} parent=5 // pred_region
        %s244 = ssub.s32 %s26, 1
        // Predicated region
        $region13: #{tpu_custom_call.1} parent=11 // pred_check
          %p245 = pneg %p73
        $region14: #{tpu_custom_call.1} parent=11 // pred_check_branch
          %247 = sbr.rel (%p245) target = $region16
        $region15: #{tpu_custom_call.1} parent=11 // pred_region
          %s249 = ssub.s32 512, 512
          %250 = vsyncadd [#allocation6], %s249
          %s251 = sshll.u32 [#allocation5], 4
          %s252 = int_to_ptr.vmem [resolvable:$true] %s251
          %257 = dma.hbm_to_vmem [thread:$0]  %s1, 512, %s252, [#allocation6], 64, 64, 4
        $region16: #{tpu_custom_call.1} parent=11 // pred_fallthru
          _
        // Predicated region
        $region17: #{tpu_custom_call.1} parent=11 // pred_check
          %p258 = pneg %p94
        $region18: #{tpu_custom_call.1} parent=11 // pred_check_branch
          %260 = sbr.rel (%p258) target = $region20
        $region19: #{tpu_custom_call.1} parent=11 // pred_region
          _
        $region20: #{tpu_custom_call.1} parent=11 // pred_fallthru
          _
        // Predicated region
        $region21: #{tpu_custom_call.1} parent=11 // pred_check
          %p261 = pneg %p115
        $region22: #{tpu_custom_call.1} parent=11 // pred_check_branch
          %263 = sbr.rel (%p261) target = $region24
        $region23: #{tpu_custom_call.1} parent=11 // pred_region
          %s265 = ssub.s32 1024, 1024
          %266 = vsyncadd [#allocation6], %s265
          %s267 = sshll.u32 [#allocation7], 4
          %s268 = int_to_ptr.vmem [resolvable:$true] %s267
          %273 = dma.hbm_to_vmem [thread:$0]  %s3, 1024, %s268, [#allocation6], 64, 64, 4
        $region24: #{tpu_custom_call.1} parent=11 // pred_fallthru
          _
        // Predicated region
        $region25: #{tpu_custom_call.1} parent=11 // pred_check
          %p274 = pneg %p136
        $region26: #{tpu_custom_call.1} parent=11 // pred_check_branch
          %276 = sbr.rel (%p274) target = $region28
        $region27: #{tpu_custom_call.1} parent=11 // pred_region
          _
        $region28: #{tpu_custom_call.1} parent=11 // pred_fallthru
          _
        // Predicated region
        $region29: #{tpu_custom_call.1} parent=11 // pred_check
          %p277 = pneg %p157
        $region30: #{tpu_custom_call.1} parent=11 // pred_check_branch
          %279 = sbr.rel (%p277) target = $region32
        $region31: #{tpu_custom_call.1} parent=11 // pred_region
          %s281 = ssub.s32 1024, 1024
          %282 = vsyncadd [#allocation9], %s281
          %s283 = sshll.u32 [#allocation8], 4
          %s284 = int_to_ptr.vmem [resolvable:$true] %s283
          %289 = dma.hbm_to_vmem [thread:$0]  %s5, 1024, %s284, [#allocation9], 64, 64, 4
        $region32: #{tpu_custom_call.1} parent=11 // pred_fallthru
          _
        // Predicated region
        $region33: #{tpu_custom_call.1} parent=11 // pred_check
          %p290 = pneg %p178
        $region34: #{tpu_custom_call.1} parent=11 // pred_check_branch
          %292 = sbr.rel (%p290) target = $region36
        $region35: #{tpu_custom_call.1} parent=11 // pred_region
          _
        $region36: #{tpu_custom_call.1} parent=11 // pred_fallthru
          _
      $region12: #{tpu_custom_call.1} parent=5 // pred_fallthru
        _
      %p293 = scmp.lt.s32.totalorder %s26, 2
      // Predicated region
      $region37: #{tpu_custom_call.1} parent=5 // pred_check
        %p294 = pneg %p293
      $region38: #{tpu_custom_call.1} parent=5 // pred_check_branch
        %296 = sbr.rel (%p294) target = $region40
      $region39: #{tpu_custom_call.1} parent=5 // pred_region
        // Predicated region
        $region41: #{tpu_custom_call.1} parent=39 // pred_check
          %p297 = pneg %p46
        $region42: #{tpu_custom_call.1} parent=39 // pred_check_branch
          %299 = sbr.rel (%p297) target = $region44
        $region43: #{tpu_custom_call.1} parent=39 // pred_region
          %s300 = sand.u32 %s36, 1
          %s301 = scalar_lea.sflag [#allocation3], %s300
          %s302 = sand.u32 %s36, 1
          %s303 = smul.addr %s302, 4
          %s304 = scalar_lea.vmem [#allocation2], %s303
          %s306 = ssub.s32 64, 64
          %307 = vsyncadd %s301, %s306
          %s308 = smul.addr %s26, 64
          %s309 = scalar_lea.hbm %s0, %s308
          %s311 = sshll.u32 %s304, 4
          %s312 = int_to_ptr.vmem [resolvable:$true] %s311
          %314 = dma.hbm_to_vmem [thread:$0]  %s309, 64, %s312, %s301
        $region44: #{tpu_custom_call.1} parent=39 // pred_fallthru
          _
      $region40: #{tpu_custom_call.1} parent=5 // pred_fallthru
        _
      %p315 = scmp.le.s32.totalorder 1, %s26
      %p316 = scmp.lt.s32.totalorder %s26, 3
      %p317 = pnand %p315, %p316
      %p318 = pneg %p317
      // Predicated region
      $region45: #{tpu_custom_call.1} parent=5 // pred_check
        _
      $region46: #{tpu_custom_call.1} parent=5 // pred_check_branch
        %320 = sbr.rel (%p317) target = $region48
      $region47: #{tpu_custom_call.1} parent=5 // pred_region
        %s321 = ssub.s32 %s26, 1
        %s322 = sand.u32 %s39, 1
        %s323 = scalar_lea.sflag [#allocation3], %s322
        %s324 = sand.u32 %s39, 1
        %s325 = smul.addr %s324, 4
        %s326 = scalar_lea.vmem [#allocation2], %s325
        // Predicated region
        $region49: #{tpu_custom_call.1} parent=47 // pred_check
          %p327 = pneg %p52
        $region50: #{tpu_custom_call.1} parent=47 // pred_check_branch
          %329 = sbr.rel (%p327) target = $region52
        $region51: #{tpu_custom_call.1} parent=47 // pred_region
          %330 = dma.done %s323, 64
        $region52: #{tpu_custom_call.1} parent=47 // pred_fallthru
          _
        // Predicated region
        $region53: #{tpu_custom_call.1} parent=47 // pred_check
          %p331 = pneg %p73
        $region54: #{tpu_custom_call.1} parent=47 // pred_check_branch
          %333 = sbr.rel (%p331) target = $region56
        $region55: #{tpu_custom_call.1} parent=47 // pred_region
          %334 = dma.done [#allocation6], 512
        $region56: #{tpu_custom_call.1} parent=47 // pred_fallthru
          _
        // Predicated region
        $region57: #{tpu_custom_call.1} parent=47 // pred_check
          %p335 = pneg %p115
        $region58: #{tpu_custom_call.1} parent=47 // pred_check_branch
          %337 = sbr.rel (%p335) target = $region60
        $region59: #{tpu_custom_call.1} parent=47 // pred_region
          %338 = dma.done [#allocation6], 1024
        $region60: #{tpu_custom_call.1} parent=47 // pred_fallthru
          _
        // Predicated region
        $region61: #{tpu_custom_call.1} parent=47 // pred_check
          %p339 = pneg %p157
        $region62: #{tpu_custom_call.1} parent=47 // pred_check_branch
          %341 = sbr.rel (%p339) target = $region64
        $region63: #{tpu_custom_call.1} parent=47 // pred_region
          %342 = dma.done [#allocation9], 1024
        $region64: #{tpu_custom_call.1} parent=47 // pred_fallthru
          _
        %s343 = sand.u32 %s39, 1
        %s344 = scalar_lea.sflag [#allocation3], %s343
        %s345 = sand.u32 %s39, 1
        %s346 = smul.addr %s345, 4
        %s347 = scalar_lea.vmem [#allocation2], %s346
        %p348 = pneg %p52
        %p349 = pneg %p49
        %p350 = pneg %p73
        %p351 = pneg %p70
        %p352 = pneg %p94
        %p353 = pneg %p91
        %p354 = pneg %p115
        %p355 = pneg %p112
        %p356 = pneg %p136
        %p357 = pneg %p133
        %p358 = pneg %p157
        %p359 = pneg %p154
        %p360 = pneg %p178
        %p361 = pneg %p175
        %p362 = pneg %p204
        %p363 = pneg %p201
        %s364 = sand.u32 %s191, 1
        %s365 = scalar_lea.sflag [#allocation4], %s364
        %s366 = sand.u32 %s191, 1
        %s367 = smul.addr %s366, 8
        %s368 = scalar_lea.vmem [#allocation10], %s367
        %p369 = pneg %p230
        %p370 = pneg %p227
        %s371 = sand.u32 %s217, 1
        %s372 = scalar_lea.sflag [#allocation12], %s371
        %s373 = sand.u32 %s217, 1
        %s374 = smul.addr %s373, 8
        %s375 = scalar_lea.vmem [#allocation11], %s374
        %v377 = vld [vmem:[%s326] sm:$0xf]
        %v378 = vld [vmem:[#allocation5] sm:$0xf]
        %v379 = vld [vmem:[#allocation5 + $0x4] sm:$0xf]
        %v380 = vld [vmem:[#allocation5 + $0x8] sm:$0xf]
        %v381 = vld [vmem:[#allocation5 + $0xc] sm:$0xf]
        %v382 = vld [vmem:[#allocation5 + $0x10] sm:$0xf]
        %v383 = vld [vmem:[#allocation5 + $0x14] sm:$0xf]
        %v384 = vld [vmem:[#allocation5 + $0x18] sm:$0xf]
        %v385 = vld [vmem:[#allocation5 + $0x1c] sm:$0xf]
        %v386 = vld [vmem:[%s2] sm:$0x1]
        %v388 = vlaneseq
        %v389 = vshrl.u32 %v388, 7
        %v390 = vsub.s32 0, %v389
        %v391 = vrot.slane %v386, %v390
        %v401 = vunpack.c.l.b16 %v378
        %v402 = vunpack.c.l.b16 %v379
        %v403 = vunpack.c.l.b16 %v380
        %v404 = vunpack.c.l.b16 %v381
        %v405 = vunpack.c.l.b16 %v382
        %v406 = vunpack.c.l.b16 %v383
        %v407 = vunpack.c.l.b16 %v384
        %v408 = vunpack.c.l.b16 %v385
        %v409 = vpack.c.b16 %v402, %v401
        %v410 = vpack.c.b16 %v404, %v403
        %v411 = vpack.c.b16 %v406, %v405
        %v412 = vpack.c.b16 %v408, %v407
        %vm417 = vcmask 523264
        %v419 = vsel %vm417, %v377, 0
        %421 = vmatprep.subr.bf16.mxu0 0
        %422 = vmatpush1.bf16.msra.mxu0 %v409
        %423 = vmatprep.subr.bf16.mxu0 0
        %424 = vmatpush1.bf16.msra.mxu0 %v410
        %425 = vmatprep.subr.bf16.mxu0 0
        %426 = vmatpush1.bf16.msra.mxu0 %v411
        %427 = vmatprep.subr.bf16.mxu0 0
        %428 = vmatpush1.bf16.msra.mxu0 %v412
        %429 = vmatprep.subr.bf16.mxu0 0
        %430 = vmatpush1.bf16.msra.mxu0 0
        %431 = vmatprep.subr.bf16.mxu0 0
        %432 = vmatpush1.bf16.msra.mxu0 0
        %433 = vmatprep.subr.bf16.mxu0 0
        %434 = vmatpush1.bf16.msra.mxu0 0
        %435 = vmatprep.subr.bf16.mxu0 0
        %436 = vmatpush1.bf16.msra.mxu0 0
        %437 = vmatprep.subr.bf16.mxu0 0
        %438 = vmatpush1.bf16.msra.mxu0 0
        %439 = vmatprep.subr.bf16.mxu0 0
        %440 = vmatpush1.bf16.msra.mxu0 0
        %441 = vmatprep.subr.bf16.mxu0 0
        %442 = vmatpush1.bf16.msra.mxu0 0
        %443 = vmatprep.subr.bf16.mxu0 0
        %444 = vmatpush1.bf16.msra.mxu0 0
        %445 = vmatprep.subr.bf16.mxu0 0
        %446 = vmatpush1.bf16.msra.mxu0 0
        %447 = vmatprep.subr.bf16.mxu0 0
        %448 = vmatpush1.bf16.msra.mxu0 0
        %449 = vmatprep.subr.bf16.mxu0 0
        %450 = vmatpush1.bf16.msra.mxu0 0
        %451 = vmatprep.subr.bf16.mxu0 0
        %452 = vmatpush1.bf16.msra.mxu0 0
        %453 = vmatprep.mubr.bf16.mxu0 0
        %454 = vmatmul.mubr.bf16.gmra.mrb[0].mxu0 %v419
        %v455 = vpop.f32.mrb[0].mxu0
        %v456 = vadd.f32 %v391, %v455
        %v457 = vpop.f32.mrb[0].mxu0
        %v458 = vpop.f32.mrb[0].mxu0
        %v459 = vpop.f32.mrb[0].mxu0
        %460 = vdwg.mxu0
        %v461 = vtanh.pop %v456
        %462 = vst [vmem:[%s368] sm:$0xff] %v461
        %v463 = vpack.c.bf16 %v461, %v461
        %v464 = vld [vmem:[#allocation7] sm:$0xf]
        %v465 = vld [vmem:[#allocation7 + $0x4] sm:$0xf]
        %v466 = vld [vmem:[#allocation7 + $0x8] sm:$0xf]
        %v467 = vld [vmem:[#allocation7 + $0xc] sm:$0xf]
        %v468 = vld [vmem:[#allocation7 + $0x10] sm:$0xf]
        %v469 = vld [vmem:[#allocation7 + $0x14] sm:$0xf]
        %v470 = vld [vmem:[#allocation7 + $0x18] sm:$0xf]
        %v471 = vld [vmem:[#allocation7 + $0x1c] sm:$0xf]
        %v472 = vld [vmem:[#allocation7 + $0x20] sm:$0xf]
        %v473 = vld [vmem:[#allocation7 + $0x24] sm:$0xf]
        %v474 = vld [vmem:[#allocation7 + $0x28] sm:$0xf]
        %v475 = vld [vmem:[#allocation7 + $0x2c] sm:$0xf]
        %v476 = vld [vmem:[#allocation7 + $0x30] sm:$0xf]
        %v477 = vld [vmem:[#allocation7 + $0x34] sm:$0xf]
        %v478 = vld [vmem:[#allocation7 + $0x38] sm:$0xf]
        %v479 = vld [vmem:[#allocation7 + $0x3c] sm:$0xf]
        %v480 = vld [vmem:[%s4] sm:$0x1]
        %v482 = vlaneseq
        %v483 = vshrl.u32 %v482, 7
        %v484 = vsub.s32 0, %v483
        %v485 = vrot.slane %v480, %v484
        %v503 = vunpack.c.l.b16 %v464
        %v504 = vunpack.c.l.b16 %v465
        %v505 = vunpack.c.l.b16 %v466
        %v506 = vunpack.c.l.b16 %v467
        %v507 = vunpack.c.l.b16 %v468
        %v508 = vunpack.c.l.b16 %v469
        %v509 = vunpack.c.l.b16 %v470
        %v510 = vunpack.c.l.b16 %v471
        %v511 = vunpack.c.l.b16 %v472
        %v512 = vunpack.c.l.b16 %v473
        %v513 = vunpack.c.l.b16 %v474
        %v514 = vunpack.c.l.b16 %v475
        %v515 = vunpack.c.l.b16 %v476
        %v516 = vunpack.c.l.b16 %v477
        %v517 = vunpack.c.l.b16 %v478
        %v518 = vunpack.c.l.b16 %v479
        %v519 = vpack.c.b16 %v504, %v503
        %v520 = vpack.c.b16 %v506, %v505
        %v521 = vpack.c.b16 %v508, %v507
        %v522 = vpack.c.b16 %v510, %v509
        %v523 = vpack.c.b16 %v512, %v511
        %v524 = vpack.c.b16 %v514, %v513
        %v525 = vpack.c.b16 %v516, %v515
        %v526 = vpack.c.b16 %v518, %v517
        %535 = vmatprep.subr.bf16.mxu0 0
        %536 = vmatpush1.bf16.msra.mxu0 %v519
        %537 = vmatprep.subr.bf16.mxu0 0
        %538 = vmatpush1.bf16.msra.mxu0 %v520
        %539 = vmatprep.subr.bf16.mxu0 0
        %540 = vmatpush1.bf16.msra.mxu0 %v521
        %541 = vmatprep.subr.bf16.mxu0 0
        %542 = vmatpush1.bf16.msra.mxu0 %v522
        %543 = vmatprep.subr.bf16.mxu0 0
        %544 = vmatpush1.bf16.msra.mxu0 %v523
        %545 = vmatprep.subr.bf16.mxu0 0
        %546 = vmatpush1.bf16.msra.mxu0 %v524
        %547 = vmatprep.subr.bf16.mxu0 0
        %548 = vmatpush1.bf16.msra.mxu0 %v525
        %549 = vmatprep.subr.bf16.mxu0 0
        %550 = vmatpush1.bf16.msra.mxu0 %v526
        %551 = vmatprep.subr.bf16.mxu0 0
        %552 = vmatpush1.bf16.msra.mxu0 0
        %553 = vmatprep.subr.bf16.mxu0 0
        %554 = vmatpush1.bf16.msra.mxu0 0
        %555 = vmatprep.subr.bf16.mxu0 0
        %556 = vmatpush1.bf16.msra.mxu0 0
        %557 = vmatprep.subr.bf16.mxu0 0
        %558 = vmatpush1.bf16.msra.mxu0 0
        %559 = vmatprep.subr.bf16.mxu0 0
        %560 = vmatpush1.bf16.msra.mxu0 0
        %561 = vmatprep.subr.bf16.mxu0 0
        %562 = vmatpush1.bf16.msra.mxu0 0
        %563 = vmatprep.subr.bf16.mxu0 0
        %564 = vmatpush1.bf16.msra.mxu0 0
        %565 = vmatprep.subr.bf16.mxu0 0
        %566 = vmatpush1.bf16.msra.mxu0 0
        %567 = vmatprep.mubr.bf16.mxu0 0
        %568 = vmatmul.mubr.bf16.gmra.mrb[0].mxu0 %v463
        %v569 = vpop.f32.mrb[0].mxu0
        %v570 = vadd.f32 %v485, %v569
        %v571 = vpop.f32.mrb[0].mxu0
        %v572 = vpop.f32.mrb[0].mxu0
        %v573 = vpop.f32.mrb[0].mxu0
        %574 = vdwg.mxu0
        %v575 = vmax.f32 %v570, 0.0
        %v576 = vpack.c.bf16 %v575, %v575
        %v577 = vld [vmem:[#allocation8] sm:$0xf]
        %v578 = vld [vmem:[#allocation8 + $0x4] sm:$0xf]
        %v579 = vld [vmem:[#allocation8 + $0x8] sm:$0xf]
        %v580 = vld [vmem:[#allocation8 + $0xc] sm:$0xf]
        %v581 = vld [vmem:[#allocation8 + $0x10] sm:$0xf]
        %v582 = vld [vmem:[#allocation8 + $0x14] sm:$0xf]
        %v583 = vld [vmem:[#allocation8 + $0x18] sm:$0xf]
        %v584 = vld [vmem:[#allocation8 + $0x1c] sm:$0xf]
        %v585 = vld [vmem:[#allocation8 + $0x20] sm:$0xf]
        %v586 = vld [vmem:[#allocation8 + $0x24] sm:$0xf]
        %v587 = vld [vmem:[#allocation8 + $0x28] sm:$0xf]
        %v588 = vld [vmem:[#allocation8 + $0x2c] sm:$0xf]
        %v589 = vld [vmem:[#allocation8 + $0x30] sm:$0xf]
        %v590 = vld [vmem:[#allocation8 + $0x34] sm:$0xf]
        %v591 = vld [vmem:[#allocation8 + $0x38] sm:$0xf]
        %v592 = vld [vmem:[#allocation8 + $0x3c] sm:$0xf]
        %v593 = vld [vmem:[%s6] sm:$0x1]
        %v595 = vlaneseq
        %v596 = vshrl.u32 %v595, 7
        %v597 = vsub.s32 0, %v596
        %v598 = vrot.slane %v593, %v597
        %v616 = vunpack.c.l.b16 %v577
        %v617 = vunpack.c.l.b16 %v578
        %v618 = vunpack.c.l.b16 %v579
        %v619 = vunpack.c.l.b16 %v580
        %v620 = vunpack.c.l.b16 %v581
        %v621 = vunpack.c.l.b16 %v582
        %v622 = vunpack.c.l.b16 %v583
        %v623 = vunpack.c.l.b16 %v584
        %v624 = vunpack.c.l.b16 %v585
        %v625 = vunpack.c.l.b16 %v586
        %v626 = vunpack.c.l.b16 %v587
        %v627 = vunpack.c.l.b16 %v588
        %v628 = vunpack.c.l.b16 %v589
        %v629 = vunpack.c.l.b16 %v590
        %v630 = vunpack.c.l.b16 %v591
        %v631 = vunpack.c.l.b16 %v592
        %v632 = vpack.c.b16 %v617, %v616
        %v633 = vpack.c.b16 %v619, %v618
        %v634 = vpack.c.b16 %v621, %v620
        %v635 = vpack.c.b16 %v623, %v622
        %v636 = vpack.c.b16 %v625, %v624
        %v637 = vpack.c.b16 %v627, %v626
        %v638 = vpack.c.b16 %v629, %v628
        %v639 = vpack.c.b16 %v631, %v630
        %648 = vmatprep.subr.bf16.mxu0 0
        %649 = vmatpush1.bf16.msra.mxu0 %v632
        %650 = vmatprep.subr.bf16.mxu0 0
        %651 = vmatpush1.bf16.msra.mxu0 %v633
        %652 = vmatprep.subr.bf16.mxu0 0
        %653 = vmatpush1.bf16.msra.mxu0 %v634
        %654 = vmatprep.subr.bf16.mxu0 0
        %655 = vmatpush1.bf16.msra.mxu0 %v635
        %656 = vmatprep.subr.bf16.mxu0 0
        %657 = vmatpush1.bf16.msra.mxu0 %v636
        %658 = vmatprep.subr.bf16.mxu0 0
        %659 = vmatpush1.bf16.msra.mxu0 %v637
        %660 = vmatprep.subr.bf16.mxu0 0
        %661 = vmatpush1.bf16.msra.mxu0 %v638
        %662 = vmatprep.subr.bf16.mxu0 0
        %663 = vmatpush1.bf16.msra.mxu0 %v639
        %664 = vmatprep.subr.bf16.mxu0 0
        %665 = vmatpush1.bf16.msra.mxu0 0
        %666 = vmatprep.subr.bf16.mxu0 0
        %667 = vmatpush1.bf16.msra.mxu0 0
        %668 = vmatprep.subr.bf16.mxu0 0
        %669 = vmatpush1.bf16.msra.mxu0 0
        %670 = vmatprep.subr.bf16.mxu0 0
        %671 = vmatpush1.bf16.msra.mxu0 0
        %672 = vmatprep.subr.bf16.mxu0 0
        %673 = vmatpush1.bf16.msra.mxu0 0
        %674 = vmatprep.subr.bf16.mxu0 0
        %675 = vmatpush1.bf16.msra.mxu0 0
        %676 = vmatprep.subr.bf16.mxu0 0
        %677 = vmatpush1.bf16.msra.mxu0 0
        %678 = vmatprep.subr.bf16.mxu0 0
        %679 = vmatpush1.bf16.msra.mxu0 0
        %680 = vmatprep.mubr.bf16.mxu0 0
        %681 = vmatmul.mubr.bf16.gmra.mrb[0].mxu0 %v576
        %v682 = vpop.f32.mrb[0].mxu0
        %v683 = vadd.f32 %v598, %v682
        %v684 = vpop.f32.mrb[0].mxu0
        %v685 = vpop.f32.mrb[0].mxu0
        %v686 = vpop.f32.mrb[0].mxu0
        %687 = vdwg.mxu0
        %688 = vst [vmem:[%s375] sm:$0xff] %v683
        %s689 = sand.u32 %s191, 1
        %s690 = scalar_lea.sflag [#allocation4], %s689
        %s691 = sand.u32 %s191, 1
        %s692 = smul.addr %s691, 8
        %s693 = scalar_lea.vmem [#allocation10], %s692
        %s694 = sand.u32 %s217, 1
        %s695 = scalar_lea.sflag [#allocation12], %s694
        %s696 = sand.u32 %s217, 1
        %s697 = smul.addr %s696, 8
        %s698 = scalar_lea.vmem [#allocation11], %s697
        // Predicated region
        $region65: #{tpu_custom_call.1} parent=47 // pred_check
          %p699 = pneg %p201
        $region66: #{tpu_custom_call.1} parent=47 // pred_check_branch
          %701 = sbr.rel (%p699) target = $region68
        $region67: #{tpu_custom_call.1} parent=47 // pred_region
          %s703 = ssub.s32 128, 128
          %704 = vsyncadd %s690, %s703
          %s705 = smul.addr %s31, 128
          %s706 = scalar_lea.hbm %s7, %s705
          %s708 = sshll.u32 %s693, 4
          %s709 = int_to_ptr.vmem [resolvable:$true] %s708
          %711 = dma.vmem_to_hbm [thread:$0]  %s709, 128, %s706, %s690
        $region68: #{tpu_custom_call.1} parent=47 // pred_fallthru
          _
        // Predicated region
        $region69: #{tpu_custom_call.1} parent=47 // pred_check
          %p712 = pneg %p227
        $region70: #{tpu_custom_call.1} parent=47 // pred_check_branch
          %714 = sbr.rel (%p712) target = $region72
        $region71: #{tpu_custom_call.1} parent=47 // pred_region
          %s716 = ssub.s32 128, 128
          %717 = vsyncadd %s695, %s716
          %s718 = smul.addr %s31, 128
          %s719 = scalar_lea.hbm %s8, %s718
          %s721 = sshll.u32 %s698, 4
          %s722 = int_to_ptr.vmem [resolvable:$true] %s721
          %724 = dma.vmem_to_hbm [thread:$0]  %s722, 128, %s719, %s695
        $region72: #{tpu_custom_call.1} parent=47 // pred_fallthru
          _
      $region48: #{tpu_custom_call.1} parent=5 // pred_fallthru
        _
      %p725 = scmp.le.s32.totalorder 2, %s26
      // Predicated region
      $region73: #{tpu_custom_call.1} parent=5 // pred_check
        %p726 = pneg %p725
      $region74: #{tpu_custom_call.1} parent=5 // pred_check_branch
        %728 = sbr.rel (%p726) target = $region76
      $region75: #{tpu_custom_call.1} parent=5 // pred_region
        %s729 = ssub.s32 %s26, 2
        // Predicated region
        $region77: #{tpu_custom_call.1} parent=75 // pred_check
          %p730 = pneg %p207
        $region78: #{tpu_custom_call.1} parent=75 // pred_check_branch
          %732 = sbr.rel (%p730) target = $region80
        $region79: #{tpu_custom_call.1} parent=75 // pred_region
          %s733 = sand.u32 %s192, 1
          %s734 = scalar_lea.sflag [#allocation4], %s733
          %s735 = sand.u32 %s192, 1
          %s736 = smul.addr %s735, 8
          %s737 = scalar_lea.vmem [#allocation10], %s736
          %738 = dma.done %s734, 128
        $region80: #{tpu_custom_call.1} parent=75 // pred_fallthru
          _
        // Predicated region
        $region81: #{tpu_custom_call.1} parent=75 // pred_check
          %p739 = pneg %p233
        $region82: #{tpu_custom_call.1} parent=75 // pred_check_branch
          %741 = sbr.rel (%p739) target = $region84
        $region83: #{tpu_custom_call.1} parent=75 // pred_region
          %s742 = sand.u32 %s218, 1
          %s743 = scalar_lea.sflag [#allocation12], %s742
          %s744 = sand.u32 %s218, 1
          %s745 = smul.addr %s744, 8
          %s746 = scalar_lea.vmem [#allocation11], %s745
          %747 = dma.done %s743, 128
        $region84: #{tpu_custom_call.1} parent=75 // pred_fallthru
          _
      $region76: #{tpu_custom_call.1} parent=5 // pred_fallthru
        _
    $region6: #{tpu_custom_call.1} parent=1 // loop_footer
      %s30 = sadd.s32 1, %s26
    $region7: #{tpu_custom_call.1} parent=1 // loop_footer_branch
      %25 = sbr.rel target = $region3
    $region8: #{tpu_custom_call.1} parent=1 // loop_exit
      _
    %748 = vsyncpa [#allocation3], 1
    %s749 = scalar_lea.sflag [#allocation3], 1
    %750 = vsyncpa %s749, 1
    %751 = vsyncpa [#allocation6], 1
    %752 = vsyncpa [#allocation9], 1
    %753 = vsyncpa [#allocation4], 1
    %s754 = scalar_lea.sflag [#allocation4], 1
    %755 = vsyncpa %s754, 1
    %756 = vsyncpa [#allocation12], 1
    %s757 = scalar_lea.sflag [#allocation12], 1
    %758 = vsyncpa %s757, 1

</llo_original>
